<compile_context>
chip_gen: v6e
topology: v6e:2x2x1
jax: 0.10.0
libtpu: 0.0.40
codegen_flags: <defaults>
</compile_context>

<pallas_src>
import math
import functools

import jax
import jax.numpy as jnp
from jax.experimental import pallas as pl
from jax.experimental.pallas import tpu as pltpu


_VMEM_BUDGET = 24 * 1024 * 1024          # target double-buffered working set
_WEIGHT_RESIDENT_BYTES = 8 * 1024 * 1024  # full-weight VMEM residency cutoff


def _round_up(x, m):
    return ((x + m - 1) // m) * m


def _round_down(x, m):
    return (x // m) * m


def _sublane(dtype):
    # dtype-correct sublane multiple: f32 -> 8, bf16 -> 16, int8/fp8 -> 32
    return max(8, 32 // dtype.itemsize)


def _pad2(a, rows, cols):
    pr, pc = rows - a.shape[0], cols - a.shape[1]
    if pr == 0 and pc == 0:
        return a                      # skip the HBM pad copy when aligned
    return jnp.pad(a, ((0, pr), (0, pc)))


def _mlp_kernel(*refs, use_bias, use_relu, use_acc, compute_dtype):
    x_ref, w_ref = refs[0], refs[1]
    b_ref = refs[2] if use_bias else None
    o_ref = refs[3] if use_bias else refs[2]
    acc_ref = refs[-1] if use_acc else o_ref   # f32 output: accumulate in place

    k = pl.program_id(2)

    @pl.when(k == 0)
    def _():
        acc_ref[...] = jnp.zeros_like(acc_ref)

    x = x_ref[...]
    w = w_ref[...]
    if x.dtype != compute_dtype:
        x = x.astype(compute_dtype)
    if w.dtype != compute_dtype:
        w = w.astype(compute_dtype)

    # Standard MXU contraction (weight already [in, out]); bf16 in, f32 acc.
    acc_ref[...] += jnp.dot(x, w, preferred_element_type=jnp.float32)

    # Epilogue: bias + activation exactly once per output tile, on the f32 acc.
    if use_bias or use_relu or use_acc:
        @pl.when(k == pl.num_programs(2) - 1)
        def _():
            r = acc_ref[...]
            if use_bias:
                r = r + b_ref[...].astype(jnp.float32)   # (1, tn) broadcast
            if use_relu:
                r = jnp.maximum(r, 0.0)
            o_ref[...] = r.astype(o_ref.dtype)


def _choose_tiles(n_al, in_al, out_al, in_b, w_b, out_b, acc_b, sub):
    # Prefer full-K / full-N weight residency: weight DMA'd from HBM once.
    if in_al * out_al * w_b <= _WEIGHT_RESIDENT_BYTES:
        tk, tn = in_al, out_al
    else:
        tk = min(in_al, 2048 if in_b <= 2 else 1024)
        tn = min(out_al, 512)
    # Size tm so the double-buffered footprint stays within the budget.
    fixed = 2 * tk * tn * w_b + 2 * tn * w_b               # weight + bias bufs
    per_row = 2 * tk * in_b + 2 * tn * out_b + tn * acc_b  # x + out + acc
    tm_max = max(sub, (_VMEM_BUDGET - fixed) // per_row)
    tm = max(sub, min(n_al, 1024, _round_down(tm_max, sub)))
    # v7x has 2 TensorCores: avoid a single block on every parallel axis.
    if (n_al // tm) <= 1 and (out_al // tn) <= 1 and n_al >= 2 * sub:
        tm = _round_up(-(-n_al // 2), sub)
    return tm, tn, tk


def mlp_layer(feats, weight, bias=None, activation=None, *,
              compute_dtype=jnp.bfloat16, tm=None, tn=None, tk=None):
    """feats: [N, in_dim]; weight: [out_dim, in_dim] (PyTorch layout); bias: [out_dim] or None.

    Operands are cast on-chip to `compute_dtype` (f32 accumulation always).
    Pass bf16 feats/weight to additionally halve HBM traffic.
    """
    n, in_dim = feats.shape
    out_dim, in_dim_w = weight.shape
    assert in_dim_w == in_dim
    use_bias = bias is not None
    use_relu = activation == "relu"

    out_dtype = feats.dtype
    use_acc = out_dtype.itemsize < 4        # scratch only for narrow outputs

    in_b = feats.dtype.itemsize
    w_b = weight.dtype.itemsize
    out_b = out_dtype.itemsize
    acc_b = 4 if use_acc else 0
    sub = max(_sublane(feats.dtype), _sublane(out_dtype))

    n_al = _round_up(n, sub)
    in_al = _round_up(in_dim, 128)
    out_al = _round_up(out_dim, 128)

    if tm is None or tn is None or tk is None:
        a_tm, a_tn, a_tk = _choose_tiles(n_al, in_al, out_al,
                                         in_b, w_b, out_b, acc_b, sub)
        tm = a_tm if tm is None else tm
        tn = a_tn if tn is None else tn
        tk = a_tk if tk is None else tk
    tm = max(sub, min(_round_up(tm, sub), n_al))
    tn = max(128, min(_round_up(tn, 128), out_al))
    tk = max(128, min(_round_up(tk, 128), in_al))

    n_pad = _round_up(n, tm)
    out_pad = _round_up(out_dim, tn)
    in_pad = _round_up(in_dim, tk)

    # Layout plumbing (no-ops when already aligned). The weight transpose/pad
    # is per-call here; for repeated calls store the weight as [in_dim, out_dim]
    # (or jit-const it) so this folds away.
    x_p = _pad2(feats, n_pad, in_pad)
    w_p = _pad2(weight.T, in_pad, out_pad)     # -> [in, out], MXU-native

    args = [x_p, w_p]
    in_specs = [
        pl.BlockSpec((tm, tk), lambda i, j, k: (i, k)),   # activations
        pl.BlockSpec((tk, tn), lambda i, j, k: (k, j)),   # weight [in, out]
    ]
    if use_bias:
        b_p = _pad2(bias.reshape(1, out_dim), 1, out_pad)
        args.append(b_p)
        in_specs.append(pl.BlockSpec((1, tn), lambda i, j, k: (0, j)))

    grid = (n_pad // tm, out_pad // tn, in_pad // tk)
    scratch_shapes = [pltpu.VMEM((tm, tn), jnp.float32)] if use_acc else []

    kernel = functools.partial(_mlp_kernel, use_bias=use_bias,
                               use_relu=use_relu, use_acc=use_acc,
                               compute_dtype=compute_dtype)

    # Double-buffered VMEM footprint; raise the scoped limit explicitly (v5e
    # default is 16 MiB) while staying well under v7x's 64 MiB physical.
    footprint = (2 * tm * tk * in_b + 2 * tk * tn * w_b
                 + (2 * tn * w_b if use_bias else 0)
                 + 2 * tm * tn * out_b + tm * tn * acc_b)
    vmem_limit = int(min(48 * 2**20, max(32 * 2**20, footprint * 5 // 4)))

    cost = pl.CostEstimate(
        flops=2 * n * in_dim * out_dim,
        transcendentals=0,
        bytes_accessed=(n * in_dim * in_b + out_dim * in_dim * w_b
                        + (out_dim * w_b if use_bias else 0)
                        + n * out_dim * out_b))

    out_p = pl.pallas_call(
        kernel,
        out_shape=jax.ShapeDtypeStruct((n_pad, out_pad), out_dtype),
        grid_spec=pltpu.PrefetchScalarGridSpec(
            num_scalar_prefetch=0,
            grid=grid,
            in_specs=in_specs,
            out_specs=pl.BlockSpec((tm, tn), lambda i, j, k: (i, j)),
            scratch_shapes=scratch_shapes,
        ),
        compiler_params=pltpu.CompilerParams(
            dimension_semantics=("parallel", "parallel", "arbitrary"),
            vmem_limit_bytes=vmem_limit),
        cost_estimate=cost,
    )(*args)

    return out_p[:n, :out_dim]


def xavier_uniform(key, out_dim, in_dim, gain=1.0, dtype=jnp.float32):
    # matches torch.nn.init.xavier_uniform_ on a [out_dim, in_dim] weight
    bound = gain * math.sqrt(6.0 / (in_dim + out_dim))
    return jax.random.uniform(key, (out_dim, in_dim), dtype,
                              minval=-bound, maxval=bound)


if __name__ == "__main__":
    key = jax.random.PRNGKey(0)
    k_x, k_w, k_x2, k_w2 = jax.random.split(key, 4)

    # MLPLayer(in_dim=32, out_dim=16, activation=relu) on 8 rows.
    n, in_dim, out_dim = 8, 32, 16
    activation = "relu"
    gain = math.sqrt(2.0) if activation == "relu" else 1.0  # calculate_gain('relu')

    feats = jax.random.normal(k_x, (n, in_dim), jnp.float32)
    weight = xavier_uniform(k_w, out_dim, in_dim, gain=gain)  # [out_dim, in_dim]
    bias = jnp.zeros((out_dim,), jnp.float32)                 # zeros_ init

    out = jax.block_until_ready(
        mlp_layer(feats, weight, bias=bias, activation=activation))
    ref = jnp.maximum(feats @ weight.T + bias, 0.0)
    assert out.shape == (n, out_dim)
    # bf16 MXU operands (f32 accumulation) -> loosened tolerance vs f32 ref.
    assert jnp.allclose(out, ref, atol=5e-2, rtol=2e-2), "mismatch vs reference"

    # no-bias / no-activation path (f32 output accumulates directly in o_ref)
    out2 = jax.block_until_ready(mlp_layer(feats, weight))
    assert jnp.allclose(out2, feats @ weight.T, atol=5e-2, rtol=2e-2), \
        "no-bias mismatch"

    # forced small tiles: exercises the full (M, N, K) grid + K accumulation
    n3, in3, out3 = 64, 512, 256
    feats3 = jax.random.normal(k_x2, (n3, in3), jnp.float32)
    weight3 = xavier_uniform(k_w2, out3, in3, gain=gain)
    bias3 = jnp.zeros((out3,), jnp.float32)
    out3_ = jax.block_until_ready(
        mlp_layer(feats3, weight3, bias=bias3, activation=activation,
                  tm=32, tn=128, tk=128))
    ref3 = jnp.maximum(feats3 @ weight3.T + bias3, 0.0)
    assert jnp.allclose(out3_, ref3, atol=5e-2, rtol=2e-2), "tiled mismatch"

    print("KERNEL_OK")
</pallas_src>

<mosaic_0001>
module attributes {stable_mosaic.version = 11 : i64} {
  func.func @_mlp_kernel(%arg0: i32, %arg1: i32, %arg2: i32, %arg3: memref<8x128xf32, #tpu.memory_space<vmem>>, %arg4: memref<128x128xf32, #tpu.memory_space<vmem>>, %arg5: memref<1x128xf32, #tpu.memory_space<vmem>>, %arg6: memref<8x128xf32, #tpu.memory_space<vmem>>) attributes {dimension_semantics = [#tpu.dimension_semantics<parallel>, #tpu.dimension_semantics<parallel>, #tpu.dimension_semantics<arbitrary>], iteration_bounds = array<i64: 1, 1, 1>, scalar_prefetch = 0 : i64, scratch_operands = 0 : i64, tpu.core_type = #tpu.core_type<tc>, window_params = [{transform_indices = @transform_0, window_bounds = array<i64: 8, 128>}, {transform_indices = @transform_1, window_bounds = array<i64: 128, 128>}, {transform_indices = @transform_2, window_bounds = array<i64: 1, 128>}, {transform_indices = @transform_3, window_bounds = array<i64: 8, 128>}]} {
    %c0_i32 = arith.constant 0 : i32
    %0 = arith.cmpi eq, %arg2, %c0_i32 : i32
    %1 = arith.extui %0 : i1 to i32
    %c0_i32_0 = arith.constant 0 : i32
    %2 = arith.cmpi ne, %1, %c0_i32_0 : i32
    scf.if %2 {
      %cst_10 = arith.constant 0.000000e+00 : f32
      %14 = vector.broadcast %cst_10 : f32 to vector<8x128xf32>
      %c0_11 = arith.constant 0 : index
      %c0_12 = arith.constant 0 : index
      %15 = vector.load %arg6[%c0_11, %c0_12] : memref<8x128xf32, #tpu.memory_space<vmem>>, vector<8x128xf32>
      tpu.vector_store %arg6[%c0_11, %c0_12], %14 {strides = array<i32>} : memref<8x128xf32, #tpu.memory_space<vmem>>, vector<8x128xf32>,
    } else {
    }
    %c0 = arith.constant 0 : index
    %c0_1 = arith.constant 0 : index
    %3 = vector.load %arg3[%c0, %c0_1] : memref<8x128xf32, #tpu.memory_space<vmem>>, vector<8x128xf32>
    %c0_2 = arith.constant 0 : index
    %c0_3 = arith.constant 0 : index
    %4 = vector.load %arg4[%c0_2, %c0_3] : memref<128x128xf32, #tpu.memory_space<vmem>>, vector<128x128xf32>
    %5 = arith.truncf %3 : vector<8x128xf32> to vector<8x128xbf16>
    %6 = arith.truncf %4 : vector<128x128xf32> to vector<128x128xbf16>
    %c0_4 = arith.constant 0 : index
    %c0_5 = arith.constant 0 : index
    %7 = vector.load %arg6[%c0_4, %c0_5] : memref<8x128xf32, #tpu.memory_space<vmem>>, vector<8x128xf32>
    %cst = arith.constant dense<0.000000e+00> : vector<8x128xf32>
    %8 = tpu.matmul %5, %6, %cst {dimension_numbers = #tpu.dot_dimension_numbers<[1], [0], [0], [1], [0, 0, 1, 1], [], []>} : vector<8x128xbf16>, vector<128x128xbf16>, vector<8x128xf32> -> vector<8x128xf32>
    %9 = arith.addf %7, %8 : vector<8x128xf32>
    %c0_6 = arith.constant 0 : index
    %c0_7 = arith.constant 0 : index
    %10 = vector.load %arg6[%c0_6, %c0_7] : memref<8x128xf32, #tpu.memory_space<vmem>>, vector<8x128xf32>
    tpu.vector_store %arg6[%c0_6, %c0_7], %9 {strides = array<i32>} : memref<8x128xf32, #tpu.memory_space<vmem>>, vector<8x128xf32>,
    %c0_i32_8 = arith.constant 0 : i32
    %11 = arith.cmpi eq, %arg2, %c0_i32_8 : i32
    %12 = arith.extui %11 : i1 to i32
    %c0_i32_9 = arith.constant 0 : i32
    %13 = arith.cmpi ne, %12, %c0_i32_9 : i32
    scf.if %13 {
      %c0_10 = arith.constant 0 : index
      %c0_11 = arith.constant 0 : index
      %14 = vector.load %arg6[%c0_10, %c0_11] : memref<8x128xf32, #tpu.memory_space<vmem>>, vector<8x128xf32>
      %c0_12 = arith.constant 0 : index
      %c0_13 = arith.constant 0 : index
      %15 = vector.load %arg5[%c0_12, %c0_13] : memref<1x128xf32, #tpu.memory_space<vmem>>, vector<1x128xf32>
      %16 = vector.broadcast %15 : vector<1x128xf32> to vector<8x128xf32>
      %17 = arith.addf %14, %16 : vector<8x128xf32>
      %cst_14 = arith.constant 0.000000e+00 : f32
      %18 = vector.broadcast %cst_14 : f32 to vector<8x128xf32>
      %19 = arith.maximumf %17, %18 : vector<8x128xf32>
      %c0_15 = arith.constant 0 : index
      %c0_16 = arith.constant 0 : index
      %20 = vector.load %arg6[%c0_15, %c0_16] : memref<8x128xf32, #tpu.memory_space<vmem>>, vector<8x128xf32>
      tpu.vector_store %arg6[%c0_15, %c0_16], %19 {strides = array<i32>} : memref<8x128xf32, #tpu.memory_space<vmem>>, vector<8x128xf32>,
    } else {
    }
    return
  }
  func.func @transform_0(%arg0: i32, %arg1: i32, %arg2: i32) -> (i32, i32) {
    %c0_i32 = arith.constant 0 : i32
    return %arg0, %arg2 : i32, i32
  }
  func.func @transform_1(%arg0: i32, %arg1: i32, %arg2: i32) -> (i32, i32) {
    %c0_i32 = arith.constant 0 : i32
    return %arg2, %arg1 : i32, i32
  }
  func.func @transform_2(%arg0: i32, %arg1: i32, %arg2: i32) -> (i32, i32) {
    %c0_i32 = arith.constant 0 : i32
    %c0_i32_0 = arith.constant 0 : i32
    return %c0_i32, %arg1 : i32, i32
  }
  func.func @transform_3(%arg0: i32, %arg1: i32, %arg2: i32) -> (i32, i32) {
    %c0_i32 = arith.constant 0 : i32
    return %arg0, %arg1 : i32, i32
  }
}

</mosaic_0001>

<llo_original>
// kernel: tpu_custom_call.1
$region0: #{tpu_custom_call.1}
  #allocation0 [shape = 'u32[]', space=smem, size = 0x4, offset = 0x4, fixed_abs, tag = 'smem constant byte address 0x4 - core index']
  #allocation1 [shape = 'u32[144,128]{1,0:T(1,128)}', space=vmem, size = 0x12000, scoped, tag = 'internal scratch']
  %s0 = inlined_call_operand.hbm [shape: f32[8,128], index: 0, kind: input, shape index: {}]
  %s1 = inlined_call_operand.hbm [shape: f32[128,128], index: 1, kind: input, shape index: {}]
  %s2 = inlined_call_operand.vmem [shape: f32[1,128], index: 2, kind: input, shape index: {}]
  %s3 = inlined_call_operand.hbm [shape: f32[8,128], index: 3, kind: output, shape index: {}]
  %s4 = sld [smem:[#allocation0]]
  $region38: #{tpu_custom_call.1} parent=0
    _
  %s6 = ssub.s32 1, %s4
  %s7 = scalar_select 0, %s6, %s4
  $region1: #{tpu_custom_call.1} parent=0
    #allocation2 [shape = 'u8[4096]{0}', space=vmem, size = 0x1000, scoped, tag = 'input window, operand 0, single buffered']
    #allocation3 [shape = 's32[1]{0}', space=sflag, size = 0x4, scoped, tag = 'scoped memory for tpu_custom_call.1']
    #allocation4 [shape = 's32[1]{0}', space=sflag, size = 0x4, scoped, tag = 'scoped memory for tpu_custom_call.1']
    #allocation5 [shape = 'u8[65536]{0}', space=vmem, size = 0x10000, scoped, tag = 'input window, operand 1, single buffered']
    #allocation6 [shape = 's32[1]{0}', space=sflag, size = 0x4, scoped, tag = 'scoped memory for tpu_custom_call.1']
    #allocation7 [shape = 'u8[4096]{0}', space=vmem, size = 0x1000, scoped, tag = 'output window, operand 0, single buffered']
    %8 = vsyncpa [#allocation3], 0
    %9 = vsyncpa [#allocation6], 0
    %10 = vsyncpa [#allocation4], 0
    // Predicated region
    $region2: #{tpu_custom_call.1} parent=1 // pred_check
      _
    $region3: #{tpu_custom_call.1} parent=1 // pred_check_branch
      %12 = sbr.rel (0) target = $region5
    $region4: #{tpu_custom_call.1} parent=1 // pred_region
      %s14 = ssub.s32 128, 128
      %15 = vsyncadd [#allocation3], %s14
      %s17 = sshll.u32 [#allocation2], 4
      %s18 = int_to_ptr.vmem [resolvable:$true] %s17
      %20 = dma.hbm_to_vmem [thread:$0]  %s0, 128, %s18, [#allocation3]
    $region5: #{tpu_custom_call.1} parent=1 // pred_fallthru
      _
    // Predicated region
    $region6: #{tpu_custom_call.1} parent=1 // pred_check
      _
    $region7: #{tpu_custom_call.1} parent=1 // pred_check_branch
      %22 = sbr.rel (0) target = $region9
    $region8: #{tpu_custom_call.1} parent=1 // pred_region
      %s24 = ssub.s32 2048, 2048
      %25 = vsyncadd [#allocation6], %s24
      %s26 = sshll.u32 [#allocation5], 4
      %s27 = int_to_ptr.vmem [resolvable:$true] %s26
      %32 = dma.hbm_to_vmem [thread:$0]  %s1, 2048, %s27, [#allocation6], 128, 128, 8
    $region9: #{tpu_custom_call.1} parent=1 // pred_fallthru
      _
    // Predicated region
    $region10: #{tpu_custom_call.1} parent=1 // pred_check
      _
    $region11: #{tpu_custom_call.1} parent=1 // pred_check_branch
      %34 = sbr.rel (0) target = $region13
    $region12: #{tpu_custom_call.1} parent=1 // pred_region
      _
    $region13: #{tpu_custom_call.1} parent=1 // pred_fallthru
      _
    // Predicated region
    $region14: #{tpu_custom_call.1} parent=1 // pred_check
      _
    $region15: #{tpu_custom_call.1} parent=1 // pred_check_branch
      %36 = sbr.rel (0) target = $region17
    $region16: #{tpu_custom_call.1} parent=1 // pred_region
      %37 = dma.done [#allocation3], 128
    $region17: #{tpu_custom_call.1} parent=1 // pred_fallthru
      _
    // Predicated region
    $region18: #{tpu_custom_call.1} parent=1 // pred_check
      _
    $region19: #{tpu_custom_call.1} parent=1 // pred_check_branch
      %39 = sbr.rel (0) target = $region21
    $region20: #{tpu_custom_call.1} parent=1 // pred_region
      %40 = dma.done [#allocation6], 2048
    $region21: #{tpu_custom_call.1} parent=1 // pred_fallthru
      _
    %p42 = scmp.eq.s32.totalorder 0, 0
    // Predicated region
    $region22: #{tpu_custom_call.1} parent=1 // pred_check
      %p43 = pneg %p42
    $region23: #{tpu_custom_call.1} parent=1 // pred_check_branch
      %45 = sbr.rel (%p43) target = $region25
    $region24: #{tpu_custom_call.1} parent=1 // pred_region
      %46 = vst [vmem:[#allocation7] sm:$0xff] 0.0
    $region25: #{tpu_custom_call.1} parent=1 // pred_fallthru
      _
    %v47 = vld [vmem:[#allocation2] sm:$0xff]
    %v48 = vld [vmem:[#allocation5] sm:$0xff]
    %v49 = vld [vmem:[#allocation5 + $0x8] sm:$0xff]
    %v50 = vld [vmem:[#allocation5 + $0x10] sm:$0xff]
    %v51 = vld [vmem:[#allocation5 + $0x18] sm:$0xff]
    %v52 = vld [vmem:[#allocation5 + $0x20] sm:$0xff]
    %v53 = vld [vmem:[#allocation5 + $0x28] sm:$0xff]
    %v54 = vld [vmem:[#allocation5 + $0x30] sm:$0xff]
    %v55 = vld [vmem:[#allocation5 + $0x38] sm:$0xff]
    %v56 = vld [vmem:[#allocation5 + $0x40] sm:$0xff]
    %v57 = vld [vmem:[#allocation5 + $0x48] sm:$0xff]
    %v58 = vld [vmem:[#allocation5 + $0x50] sm:$0xff]
    %v59 = vld [vmem:[#allocation5 + $0x58] sm:$0xff]
    %v60 = vld [vmem:[#allocation5 + $0x60] sm:$0xff]
    %v61 = vld [vmem:[#allocation5 + $0x68] sm:$0xff]
    %v62 = vld [vmem:[#allocation5 + $0x70] sm:$0xff]
    %v63 = vld [vmem:[#allocation5 + $0x78] sm:$0xff]
    %v64 = vpack.c.bf16 %v47, %v47
    %v65 = vpack.c.bf16 %v49, %v48
    %v66 = vpack.c.bf16 %v51, %v50
    %v67 = vpack.c.bf16 %v53, %v52
    %v68 = vpack.c.bf16 %v55, %v54
    %v69 = vpack.c.bf16 %v57, %v56
    %v70 = vpack.c.bf16 %v59, %v58
    %v71 = vpack.c.bf16 %v61, %v60
    %v72 = vpack.c.bf16 %v63, %v62
    %v73 = vld [vmem:[#allocation7] sm:$0xff]
    %74 = vmatprep.subr.bf16.mxu0 0
    %75 = vmatpush1.bf16.msra.mxu0 %v72
    %76 = vmatprep.subr.bf16.mxu0 0
    %77 = vmatpush1.bf16.msra.mxu0 %v71
    %78 = vmatprep.subr.bf16.mxu0 0
    %79 = vmatpush1.bf16.msra.mxu0 %v70
    %80 = vmatprep.subr.bf16.mxu0 0
    %81 = vmatpush1.bf16.msra.mxu0 %v69
    %82 = vmatprep.subr.bf16.mxu0 0
    %83 = vmatpush1.bf16.msra.mxu0 %v68
    %84 = vmatprep.subr.bf16.mxu0 0
    %85 = vmatpush1.bf16.msra.mxu0 %v67
    %86 = vmatprep.subr.bf16.mxu0 0
    %87 = vmatpush1.bf16.msra.mxu0 %v66
    %88 = vmatprep.subr.bf16.mxu0 0
    %89 = vmatpush1.bf16.msra.mxu0 %v65
    %90 = vmatprep.subr.bf16.mxu0 0
    %91 = vmatpush2.bf16.msra.mxu0 0
    %92 = vmatprep.subr.bf16.mxu0 0
    %93 = vmatpush2.bf16.msra.mxu0 0
    %94 = vmatprep.subr.bf16.mxu0 0
    %95 = vmatpush2.bf16.msra.mxu0 0
    %96 = vmatprep.subr.bf16.mxu0 0
    %97 = vmatpush2.bf16.msra.mxu0 0
    %98 = vmatprep.subr.bf16.mxu0 0
    %99 = vmatpush2.bf16.msra.mxu0 0
    %100 = vmatprep.subr.bf16.mxu0 0
    %101 = vmatpush2.bf16.msra.mxu0 0
    %102 = vmatprep.subr.bf16.mxu0 0
    %103 = vmatpush2.bf16.msra.mxu0 0
    %104 = vmatprep.subr.bf16.mxu0 0
    %105 = vmatpush2.bf16.msra.mxu0 0
    %106 = vmatprep.mubr.bf16.mxu0 0
    %107 = vmatmul.mubr.bf16.gmra.mxu0 %v64
    %v108 = vpop.f32.mrf.mxu0
    %v109 = vadd.f32 0.0, %v108
    %v110 = vpop.f32.mrf.mxu0
    %v111 = vpop.f32.mrf.mxu0
    %v112 = vpop.f32.mrf.mxu0
    %113 = vdwg.mxu0
    %v114 = vadd.f32 %v73, %v109
    %115 = vst [vmem:[#allocation7] sm:$0xff] %v114
    // Predicated region
    $region26: #{tpu_custom_call.1} parent=1 // pred_check
      %p116 = pneg %p42
    $region27: #{tpu_custom_call.1} parent=1 // pred_check_branch
      %118 = sbr.rel (%p116) target = $region29
    $region28: #{tpu_custom_call.1} parent=1 // pred_region
      %v119 = vld [vmem:[#allocation7] sm:$0xff]
      %v120 = vld [vmem:[%s2] sm:$0x1]
      %v122 = vlaneseq
      %v123 = vshrl.u32 %v122, 7
      %v124 = vsub.s32 0, %v123
      %v125 = vrot.slane %v120, %v124
      %v127 = vadd.f32 %v119, %v125
      %v128 = vmax.f32 %v127, 0.0
      %129 = vst [vmem:[#allocation7] sm:$0xff] %v128
    $region29: #{tpu_custom_call.1} parent=1 // pred_fallthru
      _
    // Predicated region
    $region30: #{tpu_custom_call.1} parent=1 // pred_check
      _
    $region31: #{tpu_custom_call.1} parent=1 // pred_check_branch
      %131 = sbr.rel (0) target = $region33
    $region32: #{tpu_custom_call.1} parent=1 // pred_region
      %s133 = ssub.s32 128, 128
      %134 = vsyncadd [#allocation4], %s133
      %s136 = sshll.u32 [#allocation7], 4
      %s137 = int_to_ptr.vmem [resolvable:$true] %s136
      %139 = dma.vmem_to_hbm [thread:$0]  %s137, 128, %s3, [#allocation4]
    $region33: #{tpu_custom_call.1} parent=1 // pred_fallthru
      _
    // Predicated region
    $region34: #{tpu_custom_call.1} parent=1 // pred_check
      _
    $region35: #{tpu_custom_call.1} parent=1 // pred_check_branch
      %141 = sbr.rel (0) target = $region37
    $region36: #{tpu_custom_call.1} parent=1 // pred_region
      %142 = dma.done [#allocation4], 128
    $region37: #{tpu_custom_call.1} parent=1 // pred_fallthru
      _
    %143 = vsyncpa [#allocation3], 1
    %144 = vsyncpa [#allocation6], 1
    %145 = vsyncpa [#allocation4], 1

</llo_original>
